<compile_context>
chip_gen: v6e
topology: v6e:2x2x1
jax: 0.10.0
libtpu: 0.0.40
codegen_flags: <defaults>
</compile_context>

<pallas_src>
import jax
import jax.numpy as jnp
from jax.experimental import pallas as pl
from jax.experimental.pallas import tpu as pltpu


def _round_up(x, m):
    return (x + m - 1) // m * m


def _emb_dims(cardinalities):
    # mirrors: [(x, min(50, round(1.6 * x ** 0.56))) for x in emb_dims]
    return [(c, min(50, round(1.6 * c ** 0.56))) for c in cardinalities]


def _make_kernel(row_offsets, cards):
    """row_offsets / cards are static Python int tuples -> folded as VPU immediates."""

    def kernel(idx_ref, table_ref, out_ref):
        # idx_ref:   (tile_n, F) int32 -- local (per-feature) category codes
        # table_ref: (C_pad, D_pad)    -- block-diagonal stacked embedding tables (bf16)
        # out_ref:   (tile_n, D_pad) f32
        idx = idx_ref[...]
        tile_n = idx.shape[0]
        c_pad = table_ref.shape[0]

        col = jax.lax.broadcasted_iota(jnp.int32, (tile_n, c_pad), 1)
        hit = None
        for f, (r_off, card) in enumerate(zip(row_offsets, cards)):
            # clamp keeps an out-of-range code inside its own feature's row block
            # (PyTorch nn.Embedding would raise instead of silently clamping).
            code = jnp.clip(idx[:, f:f + 1], 0, card - 1) + r_off
            eq = col == code
            hit = eq if hit is None else jnp.logical_or(hit, eq)
        multi_hot = hit.astype(table_ref.dtype)  # single cast; 0/1 exact in bf16

        # One MXU matmul = gather + concat of all feature embeddings (disjoint columns).
        out_ref[...] = jnp.dot(multi_hot, table_ref[...],
                               preferred_element_type=jnp.float32)

    return kernel


def make_time_categorical_embedding(cardinalities, key, table_dtype=jnp.bfloat16):
    """Returns (params, apply_fn) mimicking TimeCategoricalEmbedding.forward (eval mode)."""
    dims = _emb_dims(cardinalities)
    d_total = sum(d for _, d in dims)
    c_total = sum(c for c, _ in dims)
    d_pad = _round_up(d_total, 128)   # lane-dense output -> unmasked stores
    c_pad = _round_up(c_total, 128)   # lane-dense multi-hot / MXU contraction dim

    # Deterministic parameter init: nn.Embedding default is N(0, 1).
    big = jnp.zeros((c_pad, d_pad), jnp.float32)
    row_offsets = []
    r_off, c_off = 0, 0
    for card, dim in dims:
        key, sub = jax.random.split(key)
        w = jax.random.normal(sub, (card, dim), dtype=jnp.float32)
        big = big.at[r_off:r_off + card, c_off:c_off + dim].set(w)
        row_offsets.append(r_off)
        r_off += card
        c_off += dim
    big_table = big.astype(table_dtype)          # bf16 table: native MXU, half the VMEM
    row_offsets = tuple(row_offsets)
    cards = tuple(c for c, _ in dims)
    kernel = _make_kernel(row_offsets, cards)
    table_bytes = c_pad * d_pad * jnp.dtype(table_dtype).itemsize
    num_feat = len(dims)

    def apply_fn(x):
        # Mirrors: if len(x.size()) <= 2: return x
        if x.ndim <= 2:
            return x

        b, t, f_in = x.shape
        assert f_in == num_feat, (f_in, num_feat)
        n = b * t
        x_flat = x.reshape(n, num_feat).astype(jnp.int32)

        # Tile selection: big row-tiles amortize per-step pipeline overhead and fill
        # the MXU M-dim; for small N keep >= 2 grid steps (v7x has 2 TensorCores).
        target = 256
        if n >= 2 * target:
            tile_n = target
        else:
            tile_n = max(8, _round_up(pl.cdiv(n, 2), 8))
        n_pad = _round_up(n, tile_n)
        if n_pad != n:
            # padded rows use index 0 (valid) and are sliced off after the kernel
            x_flat = jnp.pad(x_flat, ((0, n_pad - n), (0, 0)))
        grid = (n_pad // tile_n,)

        # VMEM budget (double-buffered idx/table/out + multi-hot temporaries).
        # TODO(synk): single-buffer the constant table (pipeline_mode) once stable;
        #             for small time features the extra buffer is noise.
        vmem_needed = (2 * tile_n * num_feat * 4
                       + 2 * table_bytes
                       + 2 * tile_n * d_pad * 4
                       + tile_n * c_pad * 4)
        assert vmem_needed < 48 * 1024 * 1024, "shrink tile_n: exceeds v7x VMEM budget"
        vmem_limit = min(64 * 1024 * 1024, max(2 * vmem_needed, 16 * 1024 * 1024))

        cost = pl.CostEstimate(
            flops=2 * n_pad * c_pad * d_pad,
            transcendentals=0,
            bytes_accessed=n_pad * num_feat * 4 + table_bytes + n_pad * d_pad * 4)

        y_flat = pl.pallas_call(
            kernel,
            out_shape=jax.ShapeDtypeStruct((n_pad, d_pad), jnp.float32),
            grid_spec=pltpu.PrefetchScalarGridSpec(
                num_scalar_prefetch=0,
                grid=grid,
                in_specs=[
                    pl.BlockSpec((tile_n, num_feat), lambda i: (i, 0)),
                    pl.BlockSpec((c_pad, d_pad), lambda i: (0, 0)),
                ],
                out_specs=pl.BlockSpec((tile_n, d_pad), lambda i: (i, 0)),
            ),
            compiler_params=pltpu.CompilerParams(
                dimension_semantics=("parallel",),
                vmem_limit_bytes=vmem_limit),
            cost_estimate=cost,
        )(x_flat, big_table)

        # emb_drop: nn.Dropout in eval mode is identity (no-op here).
        return y_flat[:n, :d_total].reshape(b, t, d_total)

    return (big_table, row_offsets, dims, d_total), apply_fn


def _reference(x, big_table, row_offsets, d_total):
    # pure-JAX reference: gather shifted rows and sum (columns are disjoint -> concat)
    b, t, f = x.shape
    idx = x.reshape(-1, f).astype(jnp.int32) + jnp.asarray(row_offsets, jnp.int32)[None, :]
    gathered = jnp.take(big_table.astype(jnp.float32), idx, axis=0)   # (N, F, D_pad)
    return gathered.sum(axis=1)[:, :d_total].reshape(b, t, d_total)


if __name__ == "__main__":
    key = jax.random.PRNGKey(0)

    # e.g. month / day-of-month / weekday / hour categorical time features
    cardinalities = [12, 31, 7, 24]
    key, pkey = jax.random.split(key)
    params, apply_fn = make_time_categorical_embedding(cardinalities, pkey)
    big_table, row_offsets, dims, d_total = params

    def rand_x(key, B, T):
        cols = []
        for card, _ in dims:
            key, sub = jax.random.split(key)
            cols.append(jax.random.randint(sub, (B, T, 1), 0, card, dtype=jnp.int32))
        return key, jnp.concatenate(cols, axis=-1)   # (B, T, F) int32 category codes

    # small case: B=2, T=8 -> N=16, tile_n=8, 2 grid steps
    key, x = rand_x(key, 2, 8)
    y = jax.block_until_ready(apply_fn(x))
    y_ref = _reference(x, big_table, row_offsets, d_total)
    assert y.shape == (2, 8, d_total), y.shape
    assert jnp.allclose(y, y_ref, atol=1e-5), "small-case mismatch vs reference"

    # larger case exercising 256-row tiles + N padding + tail slice (N=560 -> 768, grid=3)
    key, x2 = rand_x(key, 8, 70)
    y2 = jax.block_until_ready(apply_fn(x2))
    y2_ref = _reference(x2, big_table, row_offsets, d_total)
    assert y2.shape == (8, 70, d_total), y2.shape
    assert jnp.allclose(y2, y2_ref, atol=1e-5), "padded-case mismatch vs reference"

    # 2-D passthrough branch (len(x.size()) <= 2 -> return x)
    x2d = x[:, 0, :]
    assert jnp.array_equal(apply_fn(x2d), x2d)

    print("KERNEL_OK")
</pallas_src>

<mosaic_0001>
module attributes {stable_mosaic.version = 11 : i64} {
  func.func @kernel(%arg0: i32, %arg1: memref<8x4xi32, #tpu.memory_space<vmem>>, %arg2: memref<128x128xbf16, #tpu.memory_space<vmem>>, %arg3: memref<8x128xf32, #tpu.memory_space<vmem>>) attributes {dimension_semantics = [#tpu.dimension_semantics<parallel>], iteration_bounds = array<i64: 2>, scalar_prefetch = 0 : i64, scratch_operands = 0 : i64, tpu.core_type = #tpu.core_type<tc>, window_params = [{transform_indices = @transform_0, window_bounds = array<i64: 8, 4>}, {pipeline_mode = #tpu.pipeline_mode<synchronous>, transform_indices = @transform_1, window_bounds = array<i64: 128, 128>}, {transform_indices = @transform_2, window_bounds = array<i64: 8, 128>}]} {
    %c0 = arith.constant 0 : index
    %c0_0 = arith.constant 0 : index
    %0 = vector.load %arg1[%c0, %c0_0] : memref<8x4xi32, #tpu.memory_space<vmem>>, vector<8x4xi32>
    %1 = tpu.iota {dimensions = array<i32: 1>} : vector<8x128xi32>
    %2 = vector.extract_strided_slice %0 {offsets = [0, 0], sizes = [8, 1], strides = [1, 1]} : vector<8x4xi32> to vector<8x1xi32>
    %c0_i32 = arith.constant 0 : i32
    %c11_i32 = arith.constant 11 : i32
    %3 = vector.broadcast %c0_i32 : i32 to vector<8x1xi32>
    %4 = arith.maxsi %3, %2 : vector<8x1xi32>
    %5 = vector.broadcast %c11_i32 : i32 to vector<8x1xi32>
    %6 = arith.minsi %5, %4 : vector<8x1xi32>
    %c0_i32_1 = arith.constant 0 : i32
    %7 = vector.broadcast %c0_i32_1 : i32 to vector<8x1xi32>
    %8 = arith.addi %6, %7 : vector<8x1xi32>
    %9 = vector.broadcast %8 : vector<8x1xi32> to vector<8x128xi32>
    %10 = arith.cmpi eq, %1, %9 : vector<8x128xi32>
    %11 = vector.extract_strided_slice %0 {offsets = [0, 1], sizes = [8, 1], strides = [1, 1]} : vector<8x4xi32> to vector<8x1xi32>
    %c0_i32_2 = arith.constant 0 : i32
    %c30_i32 = arith.constant 30 : i32
    %12 = vector.broadcast %c0_i32_2 : i32 to vector<8x1xi32>
    %13 = arith.maxsi %12, %11 : vector<8x1xi32>
    %14 = vector.broadcast %c30_i32 : i32 to vector<8x1xi32>
    %15 = arith.minsi %14, %13 : vector<8x1xi32>
    %c12_i32 = arith.constant 12 : i32
    %16 = vector.broadcast %c12_i32 : i32 to vector<8x1xi32>
    %17 = arith.addi %15, %16 : vector<8x1xi32>
    %18 = vector.broadcast %17 : vector<8x1xi32> to vector<8x128xi32>
    %19 = arith.cmpi eq, %1, %18 : vector<8x128xi32>
    %20 = arith.ori %10, %19 : vector<8x128xi1>
    %21 = vector.extract_strided_slice %0 {offsets = [0, 2], sizes = [8, 1], strides = [1, 1]} : vector<8x4xi32> to vector<8x1xi32>
    %c0_i32_3 = arith.constant 0 : i32
    %c6_i32 = arith.constant 6 : i32
    %22 = vector.broadcast %c0_i32_3 : i32 to vector<8x1xi32>
    %23 = arith.maxsi %22, %21 : vector<8x1xi32>
    %24 = vector.broadcast %c6_i32 : i32 to vector<8x1xi32>
    %25 = arith.minsi %24, %23 : vector<8x1xi32>
    %c43_i32 = arith.constant 43 : i32
    %26 = vector.broadcast %c43_i32 : i32 to vector<8x1xi32>
    %27 = arith.addi %25, %26 : vector<8x1xi32>
    %28 = vector.broadcast %27 : vector<8x1xi32> to vector<8x128xi32>
    %29 = arith.cmpi eq, %1, %28 : vector<8x128xi32>
    %30 = arith.ori %20, %29 : vector<8x128xi1>
    %31 = vector.extract_strided_slice %0 {offsets = [0, 3], sizes = [8, 1], strides = [1, 1]} : vector<8x4xi32> to vector<8x1xi32>
    %c0_i32_4 = arith.constant 0 : i32
    %c23_i32 = arith.constant 23 : i32
    %32 = vector.broadcast %c0_i32_4 : i32 to vector<8x1xi32>
    %33 = arith.maxsi %32, %31 : vector<8x1xi32>
    %34 = vector.broadcast %c23_i32 : i32 to vector<8x1xi32>
    %35 = arith.minsi %34, %33 : vector<8x1xi32>
    %c50_i32 = arith.constant 50 : i32
    %36 = vector.broadcast %c50_i32 : i32 to vector<8x1xi32>
    %37 = arith.addi %35, %36 : vector<8x1xi32>
    %38 = vector.broadcast %37 : vector<8x1xi32> to vector<8x128xi32>
    %39 = arith.cmpi eq, %1, %38 : vector<8x128xi32>
    %40 = arith.ori %30, %39 : vector<8x128xi1>
    %41 = arith.extui %40 : vector<8x128xi1> to vector<8x128xi32>
    %42 = arith.sitofp %41 : vector<8x128xi32> to vector<8x128xf32>
    %43 = arith.truncf %42 : vector<8x128xf32> to vector<8x128xbf16>
    %c0_5 = arith.constant 0 : index
    %c0_6 = arith.constant 0 : index
    %44 = vector.load %arg2[%c0_5, %c0_6] : memref<128x128xbf16, #tpu.memory_space<vmem>>, vector<128x128xbf16>
    %cst = arith.constant dense<0.000000e+00> : vector<8x128xf32>
    %45 = tpu.matmul %43, %44, %cst {dimension_numbers = #tpu.dot_dimension_numbers<[1], [0], [0], [1], [0, 0, 1, 1], [], []>} : vector<8x128xbf16>, vector<128x128xbf16>, vector<8x128xf32> -> vector<8x128xf32>
    %c0_7 = arith.constant 0 : index
    %c0_8 = arith.constant 0 : index
    %46 = vector.load %arg3[%c0_7, %c0_8] : memref<8x128xf32, #tpu.memory_space<vmem>>, vector<8x128xf32>
    tpu.vector_store %arg3[%c0_7, %c0_8], %45 {strides = array<i32>} : memref<8x128xf32, #tpu.memory_space<vmem>>, vector<8x128xf32>,
    return
  }
  func.func @transform_0(%arg0: i32) -> (i32, i32) {
    %c0_i32 = arith.constant 0 : i32
    %c0_i32_0 = arith.constant 0 : i32
    return %arg0, %c0_i32 : i32, i32
  }
  func.func @transform_1(%arg0: i32) -> (i32, i32) {
    %c0_i32 = arith.constant 0 : i32
    %c0_i32_0 = arith.constant 0 : i32
    %c0_i32_1 = arith.constant 0 : i32
    return %c0_i32, %c0_i32_0 : i32, i32
  }
  func.func @transform_2(%arg0: i32) -> (i32, i32) {
    %c0_i32 = arith.constant 0 : i32
    %c0_i32_0 = arith.constant 0 : i32
    return %arg0, %c0_i32 : i32, i32
  }
}

</mosaic_0001>

<llo_original>
// kernel: tpu_custom_call.1
$region0: #{tpu_custom_call.1}
  #allocation0 [shape = 'u32[]', space=smem, size = 0x4, offset = 0x4, fixed_abs, tag = 'smem constant byte address 0x4 - core index']
  #allocation1 [shape = 'u32[144,128]{1,0:T(1,128)}', space=vmem, size = 0x12000, scoped, tag = 'internal scratch']
  %s0 = inlined_call_operand.vmem [shape: s32[16,4], index: 0, kind: input, shape index: {}]
  %s1 = inlined_call_operand.hbm [shape: bf16[128,128], index: 1, kind: input, shape index: {}]
  %s2 = inlined_call_operand.hbm [shape: f32[16,128], index: 2, kind: output, shape index: {}]
  %s3 = sld [smem:[#allocation0]]
  $region45: #{tpu_custom_call.1} parent=0
    _
  %s5 = ssub.s32 1, %s3
  %s6 = scalar_select 0, %s5, %s3
  $region1: #{tpu_custom_call.1} parent=0
    #allocation2 [shape = 'u8[32768]{0}', space=vmem, size = 0x8000, scoped, tag = 'input window, operand 1, single buffered']
    #allocation3 [shape = 's32[2]{0}', space=sflag, size = 0x8, scoped, tag = 'scoped memory for tpu_custom_call.1']
    #allocation4 [shape = 's32[2]{0}', space=sflag, size = 0x8, scoped, tag = 'scoped memory for tpu_custom_call.1']
    #allocation5 [shape = 'u8[8192]{0}', space=vmem, size = 0x2000, scoped, tag = 'output window, operand 0']
    %7 = vsyncpa [#allocation3], 0
    %8 = vsyncpa [#allocation4], 0
    %s9 = scalar_lea.sflag [#allocation4], 1
    %10 = vsyncpa %s9, 0
    loop: start=0, step=1, limit=4
    $region2: #{tpu_custom_call.1} parent=1 // loop_pre_header
      _
    $region3: #{tpu_custom_call.1} parent=1 // loop_header
      %s12 = sphi 0, %s16
      %p13 = scmp.ge.s32.totalorder %s12, 4
      %s22 = sphi 0, %s24
      %s25 = sphi 0, %s22
      %s26 = sphi 0, %s25
      %s42 = sphi 0, %s26
      %s46 = sphi 0, %s46
      %s48 = sphi 0, %s46
      %s49 = sphi 0, %s48
      %s63 = sphi 0, %s49
      %s69 = sphi 0, %s71
      %s72 = sphi 0, %s69
      %s73 = sphi 0, %s72
      %s89 = sphi 0, %s73
    $region4: #{tpu_custom_call.1} parent=1 // loop_header_branch
      %15 = sbr.rel (%p13) target = $region8
    $region5: #{tpu_custom_call.1} parent=1 // loop_body
      %s17 = ssub.s32 %s12, 1
      %s18 = ssub.s32 %s12, 2
      %s19 = sadd.s32 %s12, 1
      %s20 = ssub.s32 %s12, %s19
      %p21 = scmp.eq.s32.totalorder %s20, 0
      %s23 = sadd.s32 %s22, 1
      %s24 = scalar_select %p21, %s22, %s23
      %p27 = pneg %p21
      %p28 = scmp.eq.s32.totalorder %s12, 1
      %p29 = por %p27, %p28
      %p30 = scmp.ne.s32.totalorder %s22, %s25
      %p31 = scmp.eq.s32.totalorder %s12, 0
      %p32 = por %p30, %p31
      %p33 = scmp.ne.s32.totalorder %s22, %s25
      %p34 = scmp.eq.s32.totalorder %s17, 1
      %p35 = por %p33, %p34
      %p36 = scmp.ne.s32.totalorder %s25, %s26
      %p37 = scmp.eq.s32.totalorder %s17, 0
      %p38 = por %p36, %p37
      %p39 = scmp.ne.s32.totalorder %s25, %s26
      %p40 = scmp.eq.s32.totalorder %s18, 1
      %p41 = por %p39, %p40
      %p43 = scmp.ne.s32.totalorder %s26, %s42
      %p44 = scmp.eq.s32.totalorder %s18, 0
      %p45 = por %p43, %p44
      %s47 = sadd.s32 %s46, 1
      %p50 = scmp.eq.s32.totalorder %s12, 1
      %p51 = scmp.ne.s32.totalorder %s46, %s48
      %p52 = scmp.eq.s32.totalorder %s12, 0
      %p53 = por %p51, %p52
      %p54 = scmp.ne.s32.totalorder %s46, %s48
      %p55 = scmp.eq.s32.totalorder %s17, 1
      %p56 = por %p54, %p55
      %p57 = scmp.ne.s32.totalorder %s48, %s49
      %p58 = scmp.eq.s32.totalorder %s17, 0
      %p59 = por %p57, %p58
      %p60 = scmp.ne.s32.totalorder %s48, %s49
      %p61 = scmp.eq.s32.totalorder %s18, 1
      %p62 = por %p60, %p61
      %p64 = scmp.ne.s32.totalorder %s49, %s63
      %p65 = scmp.eq.s32.totalorder %s18, 0
      %p66 = por %p64, %p65
      %s67 = ssub.s32 %s12, %s19
      %p68 = scmp.eq.s32.totalorder %s67, 0
      %s70 = sadd.s32 %s69, 1
      %s71 = scalar_select %p68, %s69, %s70
      %p74 = pneg %p68
      %p75 = scmp.eq.s32.totalorder %s12, 1
      %p76 = por %p74, %p75
      %p77 = scmp.ne.s32.totalorder %s69, %s72
      %p78 = scmp.eq.s32.totalorder %s12, 0
      %p79 = por %p77, %p78
      %p80 = scmp.ne.s32.totalorder %s69, %s72
      %p81 = scmp.eq.s32.totalorder %s17, 1
      %p82 = por %p80, %p81
      %p83 = scmp.ne.s32.totalorder %s72, %s73
      %p84 = scmp.eq.s32.totalorder %s17, 0
      %p85 = por %p83, %p84
      %p86 = scmp.ne.s32.totalorder %s72, %s73
      %p87 = scmp.eq.s32.totalorder %s18, 1
      %p88 = por %p86, %p87
      %p90 = scmp.ne.s32.totalorder %s73, %s89
      %p91 = scmp.eq.s32.totalorder %s18, 0
      %p92 = por %p90, %p91
      %p93 = scmp.le.s32.totalorder 1, %s12
      %p94 = scmp.lt.s32.totalorder %s12, 3
      %p95 = pnand %p93, %p94
      %p96 = pneg %p95
      // Predicated region
      $region9: #{tpu_custom_call.1} parent=5 // pred_check
        _
      $region10: #{tpu_custom_call.1} parent=5 // pred_check_branch
        %98 = sbr.rel (%p95) target = $region12
      $region11: #{tpu_custom_call.1} parent=5 // pred_region
        %s99 = ssub.s32 %s12, 1
        // Predicated region
        $region13: #{tpu_custom_call.1} parent=11 // pred_check
          %p100 = pneg %p59
        $region14: #{tpu_custom_call.1} parent=11 // pred_check_branch
          %102 = sbr.rel (%p100) target = $region16
        $region15: #{tpu_custom_call.1} parent=11 // pred_region
          %s104 = ssub.s32 1024, 1024
          %105 = vsyncadd [#allocation3], %s104
          %s106 = sshll.u32 [#allocation2], 4
          %s107 = int_to_ptr.vmem [resolvable:$true] %s106
          %112 = dma.hbm_to_vmem [thread:$0]  %s1, 1024, %s107, [#allocation3], 64, 64, 4
        $region16: #{tpu_custom_call.1} parent=11 // pred_fallthru
          _
      $region12: #{tpu_custom_call.1} parent=5 // pred_fallthru
        _
      %p113 = scmp.lt.s32.totalorder %s12, 2
      // Predicated region
      $region17: #{tpu_custom_call.1} parent=5 // pred_check
        %p114 = pneg %p113
      $region18: #{tpu_custom_call.1} parent=5 // pred_check_branch
        %116 = sbr.rel (%p114) target = $region20
      $region19: #{tpu_custom_call.1} parent=5 // pred_region
        // Predicated region
        $region21: #{tpu_custom_call.1} parent=19 // pred_check
          %p117 = pneg %p32
        $region22: #{tpu_custom_call.1} parent=19 // pred_check_branch
          %119 = sbr.rel (%p117) target = $region24
        $region23: #{tpu_custom_call.1} parent=19 // pred_region
          %p120 = scmp.lt.s32.totalorder %s12, 1
          %s121 = scalar_select %p120, %s12, 1
          %s122 = smul.addr %s121, 8
          %s123 = scalar_lea.vmem %s0, %s122
        $region24: #{tpu_custom_call.1} parent=19 // pred_fallthru
          _
      $region20: #{tpu_custom_call.1} parent=5 // pred_fallthru
        _
      %p124 = scmp.le.s32.totalorder 1, %s12
      %p125 = scmp.lt.s32.totalorder %s12, 3
      %p126 = pnand %p124, %p125
      %p127 = pneg %p126
      // Predicated region
      $region25: #{tpu_custom_call.1} parent=5 // pred_check
        _
      $region26: #{tpu_custom_call.1} parent=5 // pred_check_branch
        %129 = sbr.rel (%p126) target = $region28
      $region27: #{tpu_custom_call.1} parent=5 // pred_region
        %s130 = ssub.s32 %s12, 1
        // Predicated region
        $region29: #{tpu_custom_call.1} parent=27 // pred_check
          %p131 = pneg %p59
        $region30: #{tpu_custom_call.1} parent=27 // pred_check_branch
          %133 = sbr.rel (%p131) target = $region32
        $region31: #{tpu_custom_call.1} parent=27 // pred_region
          %134 = dma.done [#allocation3], 1024
        $region32: #{tpu_custom_call.1} parent=27 // pred_fallthru
          _
        %p135 = scmp.lt.s32.totalorder %s17, 1
        %s136 = scalar_select %p135, %s17, 1
        %s137 = smul.addr %s136, 8
        %s138 = scalar_lea.vmem %s0, %s137
        %p139 = pneg %p38
        %p140 = pneg %p35
        %p141 = pneg %p59
        %p142 = pneg %p56
        %p143 = pneg %p85
        %p144 = pneg %p82
        %s145 = sand.u32 %s72, 1
        %s146 = scalar_lea.sflag [#allocation4], %s145
        %s147 = sand.u32 %s72, 1
        %s148 = smul.addr %s147, 8
        %s149 = scalar_lea.vmem [#allocation5], %s148
        %p150 = scmp.lt.s32.totalorder %s17, 1
        %s151 = scalar_select %p150, %s17, 1
        %s152 = smul.addr %s151, 8
        %s153 = scalar_lea.vmem %s0, %s152
        %v155 = vld [vmem:[%s153] sm:$0xff]
        %v156 = vlaneseq
        %v157 = vand.u32 %v156, 127
        %vm158 = vcmp.gt.s32.totalorder %v155, 0
        %v159 = vsel %vm158, %v155, 0
        %vm160 = vcmp.lt.s32.totalorder %v159, 11
        %v161 = vsel %vm160, %v159, 11
        %162 = vset.pattern.permute.xlu0 0
        %163 = vperm.xlu0 %162, %v161
        %v164 = vpop.permute.xlu0 %163
        %vm165 = vcmp.eq.s32.totalorder %v157, %v164
        %vm166 = vcmp.lt.s32.totalorder %v159, 30
        %v167 = vsel %vm166, %v159, 30
        %v168 = vadd.s32 %v167, 12
        %169 = vset.pattern.permute.xlu0 1
        %170 = vperm.xlu0 %169, %v168
        %v171 = vpop.permute.xlu0 %170
        %vm172 = vcmp.eq.s32.totalorder %v157, %v171
        %vm173 = vmor %vm165, %vm172
        %vm174 = vcmp.lt.s32.totalorder %v159, 6
        %v175 = vsel %vm174, %v159, 6
        %v176 = vadd.s32 %v175, 43
        %177 = vset.pattern.permute.xlu0 2
        %178 = vperm.xlu0 %177, %v176
        %v179 = vpop.permute.xlu0 %178
        %vm180 = vcmp.eq.s32.totalorder %v157, %v179
        %vm181 = vmor %vm173, %vm180
        %vm182 = vcmp.lt.s32.totalorder %v159, 23
        %v183 = vsel %vm182, %v159, 23
        %v184 = vadd.s32 %v183, 50
        %185 = vset.pattern.permute.xlu0 3
        %186 = vperm.xlu0 %185, %v184
        %v187 = vpop.permute.xlu0 %186
        %vm188 = vcmp.eq.s32.totalorder %v157, %v187
        %vm189 = vmor %vm181, %vm188
        %v190 = vsel %vm189, 1, 0
        %v191 = vcvt.s32.f32 %v190
        %v192 = vpack.c.bf16 %v191, %v191
        %v193 = vld [vmem:[#allocation2] sm:$0xf]
        %v194 = vld [vmem:[#allocation2 + $0x4] sm:$0xf]
        %v195 = vld [vmem:[#allocation2 + $0x8] sm:$0xf]
        %v196 = vld [vmem:[#allocation2 + $0xc] sm:$0xf]
        %v197 = vld [vmem:[#allocation2 + $0x10] sm:$0xf]
        %v198 = vld [vmem:[#allocation2 + $0x14] sm:$0xf]
        %v199 = vld [vmem:[#allocation2 + $0x18] sm:$0xf]
        %v200 = vld [vmem:[#allocation2 + $0x1c] sm:$0xf]
        %v201 = vld [vmem:[#allocation2 + $0x20] sm:$0xf]
        %v202 = vld [vmem:[#allocation2 + $0x24] sm:$0xf]
        %v203 = vld [vmem:[#allocation2 + $0x28] sm:$0xf]
        %v204 = vld [vmem:[#allocation2 + $0x2c] sm:$0xf]
        %v205 = vld [vmem:[#allocation2 + $0x30] sm:$0xf]
        %v206 = vld [vmem:[#allocation2 + $0x34] sm:$0xf]
        %v207 = vld [vmem:[#allocation2 + $0x38] sm:$0xf]
        %v208 = vld [vmem:[#allocation2 + $0x3c] sm:$0xf]
        %v225 = vunpack.c.l.b16 %v193
        %v226 = vunpack.c.l.b16 %v194
        %v227 = vunpack.c.l.b16 %v195
        %v228 = vunpack.c.l.b16 %v196
        %v229 = vunpack.c.l.b16 %v197
        %v230 = vunpack.c.l.b16 %v198
        %v231 = vunpack.c.l.b16 %v199
        %v232 = vunpack.c.l.b16 %v200
        %v233 = vunpack.c.l.b16 %v201
        %v234 = vunpack.c.l.b16 %v202
        %v235 = vunpack.c.l.b16 %v203
        %v236 = vunpack.c.l.b16 %v204
        %v237 = vunpack.c.l.b16 %v205
        %v238 = vunpack.c.l.b16 %v206
        %v239 = vunpack.c.l.b16 %v207
        %v240 = vunpack.c.l.b16 %v208
        %v241 = vpack.c.b16 %v226, %v225
        %v242 = vpack.c.b16 %v228, %v227
        %v243 = vpack.c.b16 %v230, %v229
        %v244 = vpack.c.b16 %v232, %v231
        %v245 = vpack.c.b16 %v234, %v233
        %v246 = vpack.c.b16 %v236, %v235
        %v247 = vpack.c.b16 %v238, %v237
        %v248 = vpack.c.b16 %v240, %v239
        %257 = vmatprep.subr.bf16.mxu0 0
        %258 = vmatpush1.bf16.msra.mxu0 %v248
        %259 = vmatprep.subr.bf16.mxu0 0
        %260 = vmatpush1.bf16.msra.mxu0 %v247
        %261 = vmatprep.subr.bf16.mxu0 0
        %262 = vmatpush1.bf16.msra.mxu0 %v246
        %263 = vmatprep.subr.bf16.mxu0 0
        %264 = vmatpush1.bf16.msra.mxu0 %v245
        %265 = vmatprep.subr.bf16.mxu0 0
        %266 = vmatpush1.bf16.msra.mxu0 %v244
        %267 = vmatprep.subr.bf16.mxu0 0
        %268 = vmatpush1.bf16.msra.mxu0 %v243
        %269 = vmatprep.subr.bf16.mxu0 0
        %270 = vmatpush1.bf16.msra.mxu0 %v242
        %271 = vmatprep.subr.bf16.mxu0 0
        %272 = vmatpush1.bf16.msra.mxu0 %v241
        %273 = vmatprep.subr.bf16.mxu0 0
        %274 = vmatpush2.bf16.msra.mxu0 0
        %275 = vmatprep.subr.bf16.mxu0 0
        %276 = vmatpush2.bf16.msra.mxu0 0
        %277 = vmatprep.subr.bf16.mxu0 0
        %278 = vmatpush2.bf16.msra.mxu0 0
        %279 = vmatprep.subr.bf16.mxu0 0
        %280 = vmatpush2.bf16.msra.mxu0 0
        %281 = vmatprep.subr.bf16.mxu0 0
        %282 = vmatpush2.bf16.msra.mxu0 0
        %283 = vmatprep.subr.bf16.mxu0 0
        %284 = vmatpush2.bf16.msra.mxu0 0
        %285 = vmatprep.subr.bf16.mxu0 0
        %286 = vmatpush2.bf16.msra.mxu0 0
        %287 = vmatprep.subr.bf16.mxu0 0
        %288 = vmatpush2.bf16.msra.mxu0 0
        %289 = vmatprep.mubr.bf16.mxu0 0
        %290 = vmatmul.mubr.bf16.gmra.mxu0 %v192
        %v291 = vpop.f32.mrf.mxu0
        %v292 = vadd.f32 0.0, %v291
        %v293 = vpop.f32.mrf.mxu0
        %v294 = vpop.f32.mrf.mxu0
        %v295 = vpop.f32.mrf.mxu0
        %296 = vdwg.mxu0
        %297 = vst [vmem:[%s149] sm:$0xff] %v292
        %s298 = sand.u32 %s72, 1
        %s299 = scalar_lea.sflag [#allocation4], %s298
        %s300 = sand.u32 %s72, 1
        %s301 = smul.addr %s300, 8
        %s302 = scalar_lea.vmem [#allocation5], %s301
        // Predicated region
        $region33: #{tpu_custom_call.1} parent=27 // pred_check
          %p303 = pneg %p82
        $region34: #{tpu_custom_call.1} parent=27 // pred_check_branch
          %305 = sbr.rel (%p303) target = $region36
        $region35: #{tpu_custom_call.1} parent=27 // pred_region
          %s307 = ssub.s32 128, 128
          %308 = vsyncadd %s299, %s307
          %s309 = smul.addr %s17, 128
          %s310 = scalar_lea.hbm %s2, %s309
          %s312 = sshll.u32 %s302, 4
          %s313 = int_to_ptr.vmem [resolvable:$true] %s312
          %315 = dma.vmem_to_hbm [thread:$0]  %s313, 128, %s310, %s299
        $region36: #{tpu_custom_call.1} parent=27 // pred_fallthru
          _
      $region28: #{tpu_custom_call.1} parent=5 // pred_fallthru
        _
      %p316 = scmp.le.s32.totalorder 2, %s12
      // Predicated region
      $region37: #{tpu_custom_call.1} parent=5 // pred_check
        %p317 = pneg %p316
      $region38: #{tpu_custom_call.1} parent=5 // pred_check_branch
        %319 = sbr.rel (%p317) target = $region40
      $region39: #{tpu_custom_call.1} parent=5 // pred_region
        %s320 = ssub.s32 %s12, 2
        // Predicated region
        $region41: #{tpu_custom_call.1} parent=39 // pred_check
          %p321 = pneg %p88
        $region42: #{tpu_custom_call.1} parent=39 // pred_check_branch
          %323 = sbr.rel (%p321) target = $region44
        $region43: #{tpu_custom_call.1} parent=39 // pred_region
          %s324 = sand.u32 %s73, 1
          %s325 = scalar_lea.sflag [#allocation4], %s324
          %s326 = sand.u32 %s73, 1
          %s327 = smul.addr %s326, 8
          %s328 = scalar_lea.vmem [#allocation5], %s327
          %329 = dma.done %s325, 128
        $region44: #{tpu_custom_call.1} parent=39 // pred_fallthru
          _
      $region40: #{tpu_custom_call.1} parent=5 // pred_fallthru
        _
    $region6: #{tpu_custom_call.1} parent=1 // loop_footer
      %s16 = sadd.s32 1, %s12
    $region7: #{tpu_custom_call.1} parent=1 // loop_footer_branch
      %11 = sbr.rel target = $region3
    $region8: #{tpu_custom_call.1} parent=1 // loop_exit
      _
    %330 = vsyncpa [#allocation3], 1
    %s331 = scalar_lea.sflag [#allocation3], 1
    %332 = vsyncpa %s331, 1
    %333 = vsyncpa [#allocation4], 1
    %s334 = scalar_lea.sflag [#allocation4], 1
    %335 = vsyncpa %s334, 1

</llo_original>
